<compile_context>
chip_gen: v5e
topology: v5e:2x2
jax: 0.10.0
libtpu: 0.0.40
codegen_flags: <defaults>
</compile_context>

<pallas_src>
from dataclasses import dataclass
from functools import partial

import jax
import jax.numpy as jnp
from jax import lax
from jax.experimental import pallas as pl
from jax.experimental.pallas import tpu as pltpu

# Large finite negative (instead of -inf) so fully-masked entries never produce
# inf - inf -> NaN in the online-softmax update.
_NEG_INF = -1e30


@dataclass
class Config:
    d_model: int
    d_vocab: int
    max_size: int
    d_ff: int
    n_heads: int
    n_layers: int
    is_causal: bool
    dropout: float

    def __post_init__(self):
        assert self.d_model % self.n_heads == 0


def _flash_attn_kernel(q_ref, k_ref, v_ref, o_ref, m_scr, l_scr, acc_scr, *,
                       n_heads, head_dim, block_q, block_kv, len_kv, is_causal):
    # q_ref: (1, block_q, h*e)   k_ref/v_ref: (1, block_kv, h*e)
    # o_ref: (1, block_q, h*e)
    # m_scr/l_scr: (h, block_q, 1) f32   acc_scr: (h, block_q, e) f32
    qi = pl.program_id(1)
    ki = pl.program_id(2)

    @pl.when(ki == 0)
    def _init():
        m_scr[...] = jnp.full_like(m_scr, _NEG_INF)
        l_scr[...] = jnp.zeros_like(l_scr)
        acc_scr[...] = jnp.zeros_like(acc_scr)

    q_start = qi * block_q
    k_start = ki * block_kv
    scale = 1.0 / (head_dim ** 0.5)
    kv_padded = (len_kv % block_kv) != 0  # static

    def _accumulate():
        mask = None
        kv_valid = None
        if is_causal or kv_padded:
            row = lax.broadcasted_iota(jnp.int32, (block_q, block_kv), 0) + q_start
            col = lax.broadcasted_iota(jnp.int32, (block_q, block_kv), 1) + k_start
            if is_causal:
                mask = col <= row                    # top-left tril (as in torch)
            if kv_padded:
                inb = col < len_kv
                mask = inb if mask is None else (mask & inb)
        if kv_padded:
            kv_valid = (lax.broadcasted_iota(jnp.int32, (block_kv, 1), 0)
                        + k_start) < len_kv

        for hd in range(n_heads):                    # static unrolled head loop
            hs, he = hd * head_dim, (hd + 1) * head_dim
            # fold softmax scale into Q (block_q*e ops, not block_q*block_kv)
            q_h = q_ref[0, :, hs:he] * scale         # (bq, e), input dtype
            k_h = k_ref[0, :, hs:he]                 # (bkv, e)
            v_h = v_ref[0, :, hs:he]                 # (bkv, e)
            if kv_padded:
                v_h = jnp.where(kv_valid, v_h, jnp.zeros_like(v_h))

            # contract the e dims directly: no materialised k.T
            s = lax.dot_general(q_h, k_h, (((1,), (1,)), ((), ())),
                                preferred_element_type=jnp.float32)  # (bq, bkv)
            if mask is not None:
                s = jnp.where(mask, s, _NEG_INF)

            m_prev = m_scr[hd]                                    # (bq, 1)
            m_new = jnp.maximum(m_prev, jnp.max(s, axis=-1, keepdims=True))
            alpha = jnp.exp(m_prev - m_new)
            p = jnp.exp(s - m_new)                                # (bq, bkv) f32
            l_scr[hd] = alpha * l_scr[hd] + jnp.sum(p, axis=-1, keepdims=True)
            acc_scr[hd] = alpha * acc_scr[hd] + jnp.dot(
                p.astype(v_h.dtype), v_h, preferred_element_type=jnp.float32)
            m_scr[hd] = m_new

    if is_causal:
        # skip KV tiles that lie entirely above the diagonal (~2x less work)
        pl.when(k_start <= q_start + (block_q - 1))(_accumulate)
    else:
        _accumulate()

    @pl.when(ki == pl.num_programs(2) - 1)
    def _finalize():
        outs = []
        for hd in range(n_heads):
            # one reciprocal per q row, only at the end (not per KV tile)
            inv_l = pl.reciprocal(l_scr[hd], approx=False)
            outs.append((acc_scr[hd] * inv_l).astype(o_ref.dtype))
        # single lane-dense (block_q, h*e) store
        o_ref[0] = jnp.concatenate(outs, axis=-1)


def dot_product_attention(q, k, v, config: Config, *, block_q=256, block_kv=512):
    """q: (b, l2, h, e), k/v: (b, l1, h, e) -> (b, l2, h, e)."""
    b, l2, h, e = q.shape
    l1 = k.shape[1]
    assert k.shape == (b, l1, h, e) and v.shape == (b, l1, h, e)
    d = h * e

    # Free reshapes (contiguous trailing dims) -> lane-dense (b, l, d_model)
    # views.  No transposes, no extra HBM round trips.
    q3 = q.reshape(b, l2, d)
    k3 = k.reshape(b, l1, d)
    v3 = v.reshape(b, l1, d)

    # Tile sizes: full length if it fits, else the requested block (multiple of
    # 8).  NOTE: tune per generation -- block_kv~512 is safe on v7x (64 MiB
    # VMEM); v5e/v6e (128 MiB) can go to 1024.
    tq = l2 if l2 <= block_q else block_q
    tk = l1 if l1 <= block_kv else block_kv
    n_q = (l2 + tq - 1) // tq
    n_kv = (l1 + tk - 1) // tk

    kernel = partial(_flash_attn_kernel, n_heads=h, head_dim=e, block_q=tq,
                     block_kv=tk, len_kv=l1, is_causal=config.is_causal)

    out = pl.pallas_call(
        kernel,
        out_shape=jax.ShapeDtypeStruct((b, l2, d), q.dtype),
        grid_spec=pltpu.PrefetchScalarGridSpec(
            num_scalar_prefetch=0,
            grid=(b, n_q, n_kv),
            in_specs=[
                pl.BlockSpec((1, tq, d), lambda bi, qi, ki: (bi, qi, 0)),
                pl.BlockSpec((1, tk, d), lambda bi, qi, ki: (bi, ki, 0)),
                pl.BlockSpec((1, tk, d), lambda bi, qi, ki: (bi, ki, 0)),
            ],
            out_specs=pl.BlockSpec((1, tq, d), lambda bi, qi, ki: (bi, qi, 0)),
            scratch_shapes=[
                pltpu.VMEM((h, tq, 1), jnp.float32),   # running max  m
                pltpu.VMEM((h, tq, 1), jnp.float32),   # running sum  l
                pltpu.VMEM((h, tq, e), jnp.float32),   # output accumulator
            ],
        ),
        compiler_params=pltpu.CompilerParams(
            dimension_semantics=("parallel", "parallel", "arbitrary"),
            vmem_limit_bytes=64 * 1024 * 1024,
        ),
    )(q3, k3, v3)

    return out.reshape(b, l2, h, e)


def _reference(q, k, v, config: Config):
    e = q.shape[-1]
    scale = 1.0 / (e ** 0.5)
    s = jnp.einsum("blhe,bmhe->bhlm", q, k) * scale
    if config.is_causal:
        l2, l1 = q.shape[1], k.shape[1]
        mask = jnp.tril(jnp.ones((l2, l1), dtype=bool))
        s = jnp.where(mask[None, None], s, -jnp.inf)
    p = jax.nn.softmax(s, axis=-1)
    return jnp.einsum("bhlm,bmhe->blhe", p, v)


if __name__ == "__main__":
    cfg = Config(d_model=128, d_vocab=100, max_size=64, d_ff=256,
                 n_heads=4, n_layers=2, is_causal=True, dropout=0.0)
    h, e = cfg.n_heads, cfg.d_model // cfg.n_heads   # 4, 32

    # 1) shapes implied by the module (b=2, l=8), causal, single tile
    b, l = 2, 8
    key = jax.random.PRNGKey(0)
    kq, kk, kv_ = jax.random.split(key, 3)
    q = jax.random.normal(kq, (b, l, h, e), dtype=jnp.float32)
    k = jax.random.normal(kk, (b, l, h, e), dtype=jnp.float32)
    v = jax.random.normal(kv_, (b, l, h, e), dtype=jnp.float32)
    out = dot_product_attention(q, k, v, cfg)
    jax.block_until_ready(out)
    assert out.shape == (b, l, h, e)
    assert jnp.allclose(out, _reference(q, k, v, cfg), atol=1e-5, rtol=1e-5)

    # 2) force the multi-tile flash path (2x2 q/kv tiles) + causal tile skipping
    l2b = 32
    q2 = jax.random.normal(jax.random.PRNGKey(1), (1, l2b, h, e), jnp.float32)
    k2 = jax.random.normal(jax.random.PRNGKey(2), (1, l2b, h, e), jnp.float32)
    v2 = jax.random.normal(jax.random.PRNGKey(3), (1, l2b, h, e), jnp.float32)
    out2 = dot_product_attention(q2, k2, v2, cfg, block_q=16, block_kv=16)
    jax.block_until_ready(out2)
    assert jnp.allclose(out2, _reference(q2, k2, v2, cfg), atol=1e-5, rtol=1e-5)

    # 3) non-causal cross-attention (l2 != l1), multiple KV tiles
    cfg_nc = Config(d_model=128, d_vocab=100, max_size=64, d_ff=256,
                    n_heads=4, n_layers=2, is_causal=False, dropout=0.0)
    q3_ = jax.random.normal(jax.random.PRNGKey(4), (2, 16, h, e), jnp.float32)
    k3_ = jax.random.normal(jax.random.PRNGKey(5), (2, 24, h, e), jnp.float32)
    v3_ = jax.random.normal(jax.random.PRNGKey(6), (2, 24, h, e), jnp.float32)
    out3 = dot_product_attention(q3_, k3_, v3_, cfg_nc, block_q=8, block_kv=8)
    jax.block_until_ready(out3)
    assert jnp.allclose(out3, _reference(q3_, k3_, v3_, cfg_nc),
                        atol=1e-5, rtol=1e-5)

    print("KERNEL_OK")
</pallas_src>

<mosaic_0001>
module attributes {stable_mosaic.version = 11 : i64} {
  func.func @_flash_attn_kernel(%arg0: i32, %arg1: i32, %arg2: i32, %arg3: memref<1x8x128xf32, #tpu.memory_space<vmem>>, %arg4: memref<1x8x128xf32, #tpu.memory_space<vmem>>, %arg5: memref<1x8x128xf32, #tpu.memory_space<vmem>>, %arg6: memref<1x8x128xf32, #tpu.memory_space<vmem>>, %arg7: memref<4x8x1xf32, #tpu.memory_space<vmem>>, %arg8: memref<4x8x1xf32, #tpu.memory_space<vmem>>, %arg9: memref<4x8x32xf32, #tpu.memory_space<vmem>>) attributes {dimension_semantics = [#tpu.dimension_semantics<parallel>, #tpu.dimension_semantics<parallel>, #tpu.dimension_semantics<arbitrary>], iteration_bounds = array<i64: 2, 1, 1>, scalar_prefetch = 0 : i64, scratch_operands = 3 : i64, tpu.core_type = #tpu.core_type<tc>, window_params = [{transform_indices = @transform_0, window_bounds = array<i64: 1, 8, 128>}, {transform_indices = @transform_1, window_bounds = array<i64: 1, 8, 128>}, {transform_indices = @transform_2, window_bounds = array<i64: 1, 8, 128>}, {transform_indices = @transform_3, window_bounds = array<i64: 1, 8, 128>}]} {
    %c0_i32 = arith.constant 0 : i32
    %0 = arith.cmpi eq, %arg2, %c0_i32 : i32
    %1 = arith.extui %0 : i1 to i32
    %c0_i32_0 = arith.constant 0 : i32
    %2 = arith.cmpi ne, %1, %c0_i32_0 : i32
    scf.if %2 {
      %cst = arith.constant -1.000000e+30 : f32
      %12 = vector.broadcast %cst : f32 to vector<4x8x1xf32>
      %c0 = arith.constant 0 : index
      %c0_5 = arith.constant 0 : index
      %c0_6 = arith.constant 0 : index
      %13 = vector.load %arg7[%c0, %c0_5, %c0_6] : memref<4x8x1xf32, #tpu.memory_space<vmem>>, vector<4x8x1xf32>
      tpu.vector_store %arg7[%c0, %c0_5, %c0_6], %12 {strides = array<i32>} : memref<4x8x1xf32, #tpu.memory_space<vmem>>, vector<4x8x1xf32>,
      %cst_7 = arith.constant 0.000000e+00 : f32
      %14 = vector.broadcast %cst_7 : f32 to vector<4x8x1xf32>
      %c0_8 = arith.constant 0 : index
      %c0_9 = arith.constant 0 : index
      %c0_10 = arith.constant 0 : index
      %15 = vector.load %arg8[%c0_8, %c0_9, %c0_10] : memref<4x8x1xf32, #tpu.memory_space<vmem>>, vector<4x8x1xf32>
      tpu.vector_store %arg8[%c0_8, %c0_9, %c0_10], %14 {strides = array<i32>} : memref<4x8x1xf32, #tpu.memory_space<vmem>>, vector<4x8x1xf32>,
      %cst_11 = arith.constant 0.000000e+00 : f32
      %16 = vector.broadcast %cst_11 : f32 to vector<4x8x32xf32>
      %c0_12 = arith.constant 0 : index
      %c0_13 = arith.constant 0 : index
      %c0_14 = arith.constant 0 : index
      %17 = vector.load %arg9[%c0_12, %c0_13, %c0_14] : memref<4x8x32xf32, #tpu.memory_space<vmem>>, vector<4x8x32xf32>
      tpu.vector_store %arg9[%c0_12, %c0_13, %c0_14], %16 {strides = array<i32>} : memref<4x8x32xf32, #tpu.memory_space<vmem>>, vector<4x8x32xf32>,
    } else {
    }
    %c8_i32 = arith.constant 8 : i32
    %3 = arith.muli %arg1, %c8_i32 : i32
    %c8_i32_1 = arith.constant 8 : i32
    %4 = arith.muli %arg2, %c8_i32_1 : i32
    %c7_i32 = arith.constant 7 : i32
    %5 = arith.addi %3, %c7_i32 : i32
    %6 = arith.cmpi sle, %4, %5 : i32
    %7 = arith.extui %6 : i1 to i32
    %c0_i32_2 = arith.constant 0 : i32
    %8 = arith.cmpi ne, %7, %c0_i32_2 : i32
    scf.if %8 {
      %12 = tpu.iota {dimensions = array<i32: 0>} : vector<8x8xi32>
      %13 = vector.broadcast %3 : i32 to vector<8x8xi32>
      %14 = arith.addi %12, %13 : vector<8x8xi32>
      %15 = tpu.iota {dimensions = array<i32: 1>} : vector<8x8xi32>
      %16 = vector.broadcast %4 : i32 to vector<8x8xi32>
      %17 = arith.addi %15, %16 : vector<8x8xi32>
      %18 = arith.cmpi sle, %17, %14 : vector<8x8xi32>
      %c0 = arith.constant 0 : index
      %c0_5 = arith.constant 0 : index
      %c0_6 = arith.constant 0 : index
      %19 = vector.load %arg3[%c0, %c0_5, %c0_6] : memref<1x8x128xf32, #tpu.memory_space<vmem>>, vector<1x8x32xf32>
      %20 = vector.shape_cast %19 : vector<1x8x32xf32> to vector<8x32xf32>
      %cst = arith.constant 0.176776692 : f32
      %21 = vector.broadcast %cst : f32 to vector<8x32xf32>
      %22 = arith.mulf %20, %21 : vector<8x32xf32>
      %c0_7 = arith.constant 0 : index
      %c0_8 = arith.constant 0 : index
      %c0_9 = arith.constant 0 : index
      %23 = vector.load %arg4[%c0_7, %c0_8, %c0_9] : memref<1x8x128xf32, #tpu.memory_space<vmem>>, vector<1x8x32xf32>
      %24 = vector.shape_cast %23 : vector<1x8x32xf32> to vector<8x32xf32>
      %c0_10 = arith.constant 0 : index
      %c0_11 = arith.constant 0 : index
      %c0_12 = arith.constant 0 : index
      %25 = vector.load %arg5[%c0_10, %c0_11, %c0_12] : memref<1x8x128xf32, #tpu.memory_space<vmem>>, vector<1x8x32xf32>
      %26 = vector.shape_cast %25 : vector<1x8x32xf32> to vector<8x32xf32>
      %cst_13 = arith.constant dense<0.000000e+00> : vector<8x8xf32>
      %27 = tpu.matmul %22, %24, %cst_13 {dimension_numbers = #tpu.dot_dimension_numbers<[1], [1], [0], [0], [0, 0, 1, 0], [], []>} : vector<8x32xf32>, vector<8x32xf32>, vector<8x8xf32> -> vector<8x8xf32>
      %cst_14 = arith.constant -1.000000e+30 : f32
      %28 = vector.broadcast %cst_14 : f32 to vector<8x8xf32>
      %29 = arith.select %18, %27, %28 : vector<8x8xi1>, vector<8x8xf32>
      %c0_15 = arith.constant 0 : index
      %c0_16 = arith.constant 0 : index
      %c0_17 = arith.constant 0 : index
      %30 = vector.load %arg7[%c0_15, %c0_16, %c0_17] : memref<4x8x1xf32, #tpu.memory_space<vmem>>, vector<1x8x1xf32>
      %31 = vector.shape_cast %30 : vector<1x8x1xf32> to vector<8x1xf32>
      %cst_18 = arith.constant dense<0xFF800000> : vector<8xf32>
      %32 = vector.multi_reduction <maximumf>, %29, %cst_18 [1] : vector<8x8xf32> to vector<8xf32>
      %33 = vector.shape_cast %32 : vector<8xf32> to vector<8x1xf32>
      %34 = arith.maximumf %31, %33 : vector<8x1xf32>
      %35 = arith.subf %31, %34 : vector<8x1xf32>
      %36 = math.exp %35 : vector<8x1xf32>
      %37 = vector.broadcast %34 : vector<8x1xf32> to vector<8x8xf32>
      %38 = arith.subf %29, %37 : vector<8x8xf32>
      %39 = math.exp %38 : vector<8x8xf32>
      %c0_19 = arith.constant 0 : index
      %c0_20 = arith.constant 0 : index
      %c0_21 = arith.constant 0 : index
      %40 = vector.load %arg8[%c0_19, %c0_20, %c0_21] : memref<4x8x1xf32, #tpu.memory_space<vmem>>, vector<1x8x1xf32>
      %41 = vector.shape_cast %40 : vector<1x8x1xf32> to vector<8x1xf32>
      %42 = arith.mulf %36, %41 : vector<8x1xf32>
      %cst_22 = arith.constant dense<0.000000e+00> : vector<8xf32>
      %43 = vector.multi_reduction <add>, %39, %cst_22 [1] : vector<8x8xf32> to vector<8xf32>
      %44 = vector.shape_cast %43 : vector<8xf32> to vector<8x1xf32>
      %45 = arith.addf %42, %44 : vector<8x1xf32>
      %c0_23 = arith.constant 0 : index
      %c0_24 = arith.constant 0 : index
      %c0_25 = arith.constant 0 : index
      %46 = vector.load %arg8[%c0_23, %c0_24, %c0_25] : memref<4x8x1xf32, #tpu.memory_space<vmem>>, vector<1x8x1xf32>
      %47 = vector.shape_cast %46 : vector<1x8x1xf32> to vector<8x1xf32>
      %48 = vector.shape_cast %45 : vector<8x1xf32> to vector<1x8x1xf32>
      tpu.vector_store %arg8[%c0_23, %c0_24, %c0_25], %48 {strides = array<i32>} : memref<4x8x1xf32, #tpu.memory_space<vmem>>, vector<1x8x1xf32>,
      %c0_26 = arith.constant 0 : index
      %c0_27 = arith.constant 0 : index
      %c0_28 = arith.constant 0 : index
      %49 = vector.load %arg9[%c0_26, %c0_27, %c0_28] : memref<4x8x32xf32, #tpu.memory_space<vmem>>, vector<1x8x32xf32>
      %50 = vector.shape_cast %49 : vector<1x8x32xf32> to vector<8x32xf32>
      %51 = vector.broadcast %36 : vector<8x1xf32> to vector<8x32xf32>
      %52 = arith.mulf %51, %50 : vector<8x32xf32>
      %cst_29 = arith.constant dense<0.000000e+00> : vector<8x32xf32>
      %53 = tpu.matmul %39, %26, %cst_29 {dimension_numbers = #tpu.dot_dimension_numbers<[1], [0], [0], [1], [0, 0, 1, 1], [], []>} : vector<8x8xf32>, vector<8x32xf32>, vector<8x32xf32> -> vector<8x32xf32>
      %54 = arith.addf %52, %53 : vector<8x32xf32>
      %c0_30 = arith.constant 0 : index
      %c0_31 = arith.constant 0 : index
      %c0_32 = arith.constant 0 : index
      %55 = vector.load %arg9[%c0_30, %c0_31, %c0_32] : memref<4x8x32xf32, #tpu.memory_space<vmem>>, vector<1x8x32xf32>
      %56 = vector.shape_cast %55 : vector<1x8x32xf32> to vector<8x32xf32>
      %57 = vector.shape_cast %54 : vector<8x32xf32> to vector<1x8x32xf32>
      tpu.vector_store %arg9[%c0_30, %c0_31, %c0_32], %57 {strides = array<i32>} : memref<4x8x32xf32, #tpu.memory_space<vmem>>, vector<1x8x32xf32>,
      %c0_33 = arith.constant 0 : index
      %c0_34 = arith.constant 0 : index
      %c0_35 = arith.constant 0 : index
      %58 = vector.load %arg7[%c0_33, %c0_34, %c0_35] : memref<4x8x1xf32, #tpu.memory_space<vmem>>, vector<1x8x1xf32>
      %59 = vector.shape_cast %58 : vector<1x8x1xf32> to vector<8x1xf32>
      %60 = vector.shape_cast %34 : vector<8x1xf32> to vector<1x8x1xf32>
      tpu.vector_store %arg7[%c0_33, %c0_34, %c0_35], %60 {strides = array<i32>} : memref<4x8x1xf32, #tpu.memory_space<vmem>>, vector<1x8x1xf32>,
      %c0_36 = arith.constant 0 : index
      %c0_37 = arith.constant 0 : index
      %c32 = arith.constant 32 : index
      %61 = vector.load %arg3[%c0_36, %c0_37, %c32] : memref<1x8x128xf32, #tpu.memory_space<vmem>>, vector<1x8x32xf32>
      %62 = vector.shape_cast %61 : vector<1x8x32xf32> to vector<8x32xf32>
      %cst_38 = arith.constant 0.176776692 : f32
      %63 = vector.broadcast %cst_38 : f32 to vector<8x32xf32>
      %64 = arith.mulf %62, %63 : vector<8x32xf32>
      %c0_39 = arith.constant 0 : index
      %c0_40 = arith.constant 0 : index
      %c32_41 = arith.constant 32 : index
      %65 = vector.load %arg4[%c0_39, %c0_40, %c32_41] : memref<1x8x128xf32, #tpu.memory_space<vmem>>, vector<1x8x32xf32>
      %66 = vector.shape_cast %65 : vector<1x8x32xf32> to vector<8x32xf32>
      %c0_42 = arith.constant 0 : index
      %c0_43 = arith.constant 0 : index
      %c32_44 = arith.constant 32 : index
      %67 = vector.load %arg5[%c0_42, %c0_43, %c32_44] : memref<1x8x128xf32, #tpu.memory_space<vmem>>, vector<1x8x32xf32>
      %68 = vector.shape_cast %67 : vector<1x8x32xf32> to vector<8x32xf32>
      %cst_45 = arith.constant dense<0.000000e+00> : vector<8x8xf32>
      %69 = tpu.matmul %64, %66, %cst_45 {dimension_numbers = #tpu.dot_dimension_numbers<[1], [1], [0], [0], [0, 0, 1, 0], [], []>} : vector<8x32xf32>, vector<8x32xf32>, vector<8x8xf32> -> vector<8x8xf32>
      %cst_46 = arith.constant -1.000000e+30 : f32
      %70 = vector.broadcast %cst_46 : f32 to vector<8x8xf32>
      %71 = arith.select %18, %69, %70 : vector<8x8xi1>, vector<8x8xf32>
      %c1 = arith.constant 1 : index
      %c0_47 = arith.constant 0 : index
      %c0_48 = arith.constant 0 : index
      %72 = vector.load %arg7[%c1, %c0_47, %c0_48] : memref<4x8x1xf32, #tpu.memory_space<vmem>>, vector<1x8x1xf32>
      %73 = vector.shape_cast %72 : vector<1x8x1xf32> to vector<8x1xf32>
      %cst_49 = arith.constant dense<0xFF800000> : vector<8xf32>
      %74 = vector.multi_reduction <maximumf>, %71, %cst_49 [1] : vector<8x8xf32> to vector<8xf32>
      %75 = vector.shape_cast %74 : vector<8xf32> to vector<8x1xf32>
      %76 = arith.maximumf %73, %75 : vector<8x1xf32>
      %77 = arith.subf %73, %76 : vector<8x1xf32>
      %78 = math.exp %77 : vector<8x1xf32>
      %79 = vector.broadcast %76 : vector<8x1xf32> to vector<8x8xf32>
      %80 = arith.subf %71, %79 : vector<8x8xf32>
      %81 = math.exp %80 : vector<8x8xf32>
      %c1_50 = arith.constant 1 : index
      %c0_51 = arith.constant 0 : index
      %c0_52 = arith.constant 0 : index
      %82 = vector.load %arg8[%c1_50, %c0_51, %c0_52] : memref<4x8x1xf32, #tpu.memory_space<vmem>>, vector<1x8x1xf32>
      %83 = vector.shape_cast %82 : vector<1x8x1xf32> to vector<8x1xf32>
      %84 = arith.mulf %78, %83 : vector<8x1xf32>
      %cst_53 = arith.constant dense<0.000000e+00> : vector<8xf32>
      %85 = vector.multi_reduction <add>, %81, %cst_53 [1] : vector<8x8xf32> to vector<8xf32>
      %86 = vector.shape_cast %85 : vector<8xf32> to vector<8x1xf32>
      %87 = arith.addf %84, %86 : vector<8x1xf32>
      %c1_54 = arith.constant 1 : index
      %c0_55 = arith.constant 0 : index
      %c0_56 = arith.constant 0 : index
      %88 = vector.load %arg8[%c1_54, %c0_55, %c0_56] : memref<4x8x1xf32, #tpu.memory_space<vmem>>, vector<1x8x1xf32>
      %89 = vector.shape_cast %88 : vector<1x8x1xf32> to vector<8x1xf32>
      %90 = vector.shape_cast %87 : vector<8x1xf32> to vector<1x8x1xf32>
      tpu.vector_store %arg8[%c1_54, %c0_55, %c0_56], %90 {strides = array<i32>} : memref<4x8x1xf32, #tpu.memory_space<vmem>>, vector<1x8x1xf32>,
      %c1_57 = arith.constant 1 : index
      %c0_58 = arith.constant 0 : index
      %c0_59 = arith.constant 0 : index
      %91 = vector.load %arg9[%c1_57, %c0_58, %c0_59] : memref<4x8x32xf32, #tpu.memory_space<vmem>>, vector<1x8x32xf32>
      %92 = vector.shape_cast %91 : vector<1x8x32xf32> to vector<8x32xf32>
      %93 = vector.broadcast %78 : vector<8x1xf32> to vector<8x32xf32>
      %94 = arith.mulf %93, %92 : vector<8x32xf32>
      %cst_60 = arith.constant dense<0.000000e+00> : vector<8x32xf32>
      %95 = tpu.matmul %81, %68, %cst_60 {dimension_numbers = #tpu.dot_dimension_numbers<[1], [0], [0], [1], [0, 0, 1, 1], [], []>} : vector<8x8xf32>, vector<8x32xf32>, vector<8x32xf32> -> vector<8x32xf32>
      %96 = arith.addf %94, %95 : vector<8x32xf32>
      %c1_61 = arith.constant 1 : index
      %c0_62 = arith.constant 0 : index
      %c0_63 = arith.constant 0 : index
      %97 = vector.load %arg9[%c1_61, %c0_62, %c0_63] : memref<4x8x32xf32, #tpu.memory_space<vmem>>, vector<1x8x32xf32>
      %98 = vector.shape_cast %97 : vector<1x8x32xf32> to vector<8x32xf32>
      %99 = vector.shape_cast %96 : vector<8x32xf32> to vector<1x8x32xf32>
      tpu.vector_store %arg9[%c1_61, %c0_62, %c0_63], %99 {strides = array<i32>} : memref<4x8x32xf32, #tpu.memory_space<vmem>>, vector<1x8x32xf32>,
      %c1_64 = arith.constant 1 : index
      %c0_65 = arith.constant 0 : index
      %c0_66 = arith.constant 0 : index
      %100 = vector.load %arg7[%c1_64, %c0_65, %c0_66] : memref<4x8x1xf32, #tpu.memory_space<vmem>>, vector<1x8x1xf32>
      %101 = vector.shape_cast %100 : vector<1x8x1xf32> to vector<8x1xf32>
      %102 = vector.shape_cast %76 : vector<8x1xf32> to vector<1x8x1xf32>
      tpu.vector_store %arg7[%c1_64, %c0_65, %c0_66], %102 {strides = array<i32>} : memref<4x8x1xf32, #tpu.memory_space<vmem>>, vector<1x8x1xf32>,
      %c0_67 = arith.constant 0 : index
      %c0_68 = arith.constant 0 : index
      %c64 = arith.constant 64 : index
      %103 = vector.load %arg3[%c0_67, %c0_68, %c64] : memref<1x8x128xf32, #tpu.memory_space<vmem>>, vector<1x8x32xf32>
      %104 = vector.shape_cast %103 : vector<1x8x32xf32> to vector<8x32xf32>
      %cst_69 = arith.constant 0.176776692 : f32
      %105 = vector.broadcast %cst_69 : f32 to vector<8x32xf32>
      %106 = arith.mulf %104, %105 : vector<8x32xf32>
      %c0_70 = arith.constant 0 : index
      %c0_71 = arith.constant 0 : index
      %c64_72 = arith.constant 64 : index
      %107 = vector.load %arg4[%c0_70, %c0_71, %c64_72] : memref<1x8x128xf32, #tpu.memory_space<vmem>>, vector<1x8x32xf32>
      %108 = vector.shape_cast %107 : vector<1x8x32xf32> to vector<8x32xf32>
      %c0_73 = arith.constant 0 : index
      %c0_74 = arith.constant 0 : index
      %c64_75 = arith.constant 64 : index
      %109 = vector.load %arg5[%c0_73, %c0_74, %c64_75] : memref<1x8x128xf32, #tpu.memory_space<vmem>>, vector<1x8x32xf32>
      %110 = vector.shape_cast %109 : vector<1x8x32xf32> to vector<8x32xf32>
      %cst_76 = arith.constant dense<0.000000e+00> : vector<8x8xf32>
      %111 = tpu.matmul %106, %108, %cst_76 {dimension_numbers = #tpu.dot_dimension_numbers<[1], [1], [0], [0], [0, 0, 1, 0], [], []>} : vector<8x32xf32>, vector<8x32xf32>, vector<8x8xf32> -> vector<8x8xf32>
      %cst_77 = arith.constant -1.000000e+30 : f32
      %112 = vector.broadcast %cst_77 : f32 to vector<8x8xf32>
      %113 = arith.select %18, %111, %112 : vector<8x8xi1>, vector<8x8xf32>
      %c2 = arith.constant 2 : index
      %c0_78 = arith.constant 0 : index
      %c0_79 = arith.constant 0 : index
      %114 = vector.load %arg7[%c2, %c0_78, %c0_79] : memref<4x8x1xf32, #tpu.memory_space<vmem>>, vector<1x8x1xf32>
      %115 = vector.shape_cast %114 : vector<1x8x1xf32> to vector<8x1xf32>
      %cst_80 = arith.constant dense<0xFF800000> : vector<8xf32>
      %116 = vector.multi_reduction <maximumf>, %113, %cst_80 [1] : vector<8x8xf32> to vector<8xf32>
      %117 = vector.shape_cast %116 : vector<8xf32> to vector<8x1xf32>
      %118 = arith.maximumf %115, %117 : vector<8x1xf32>
      %119 = arith.subf %115, %118 : vector<8x1xf32>
      %120 = math.exp %119 : vector<8x1xf32>
      %121 = vector.broadcast %118 : vector<8x1xf32> to vector<8x8xf32>
      %122 = arith.subf %113, %121 : vector<8x8xf32>
      %123 = math.exp %122 : vector<8x8xf32>
      %c2_81 = arith.constant 2 : index
      %c0_82 = arith.constant 0 : index
      %c0_83 = arith.constant 0 : index
      %124 = vector.load %arg8[%c2_81, %c0_82, %c0_83] : memref<4x8x1xf32, #tpu.memory_space<vmem>>, vector<1x8x1xf32>
      %125 = vector.shape_cast %124 : vector<1x8x1xf32> to vector<8x1xf32>
      %126 = arith.mulf %120, %125 : vector<8x1xf32>
      %cst_84 = arith.constant dense<0.000000e+00> : vector<8xf32>
      %127 = vector.multi_reduction <add>, %123, %cst_84 [1] : vector<8x8xf32> to vector<8xf32>
      %128 = vector.shape_cast %127 : vector<8xf32> to vector<8x1xf32>
      %129 = arith.addf %126, %128 : vector<8x1xf32>
      %c2_85 = arith.constant 2 : index
      %c0_86 = arith.constant 0 : index
      %c0_87 = arith.constant 0 : index
      %130 = vector.load %arg8[%c2_85, %c0_86, %c0_87] : memref<4x8x1xf32, #tpu.memory_space<vmem>>, vector<1x8x1xf32>
      %131 = vector.shape_cast %130 : vector<1x8x1xf32> to vector<8x1xf32>
      %132 = vector.shape_cast %129 : vector<8x1xf32> to vector<1x8x1xf32>
      tpu.vector_store %arg8[%c2_85, %c0_86, %c0_87], %132 {strides = array<i32>} : memref<4x8x1xf32, #tpu.memory_space<vmem>>, vector<1x8x1xf32>,
      %c2_88 = arith.constant 2 : index
      %c0_89 = arith.constant 0 : index
      %c0_90 = arith.constant 0 : index
      %133 = vector.load %arg9[%c2_88, %c0_89, %c0_90] : memref<4x8x32xf32, #tpu.memory_space<vmem>>, vector<1x8x32xf32>
      %134 = vector.shape_cast %133 : vector<1x8x32xf32> to vector<8x32xf32>
      %135 = vector.broadcast %120 : vector<8x1xf32> to vector<8x32xf32>
      %136 = arith.mulf %135, %134 : vector<8x32xf32>
      %cst_91 = arith.constant dense<0.000000e+00> : vector<8x32xf32>
      %137 = tpu.matmul %123, %110, %cst_91 {dimension_numbers = #tpu.dot_dimension_numbers<[1], [0], [0], [1], [0, 0, 1, 1], [], []>} : vector<8x8xf32>, vector<8x32xf32>, vector<8x32xf32> -> vector<8x32xf32>
      %138 = arith.addf %136, %137 : vector<8x32xf32>
      %c2_92 = arith.constant 2 : index
      %c0_93 = arith.constant 0 : index
      %c0_94 = arith.constant 0 : index
      %139 = vector.load %arg9[%c2_92, %c0_93, %c0_94] : memref<4x8x32xf32, #tpu.memory_space<vmem>>, vector<1x8x32xf32>
      %140 = vector.shape_cast %139 : vector<1x8x32xf32> to vector<8x32xf32>
      %141 = vector.shape_cast %138 : vector<8x32xf32> to vector<1x8x32xf32>
      tpu.vector_store %arg9[%c2_92, %c0_93, %c0_94], %141 {strides = array<i32>} : memref<4x8x32xf32, #tpu.memory_space<vmem>>, vector<1x8x32xf32>,
      %c2_95 = arith.constant 2 : index
      %c0_96 = arith.constant 0 : index
      %c0_97 = arith.constant 0 : index
      %142 = vector.load %arg7[%c2_95, %c0_96, %c0_97] : memref<4x8x1xf32, #tpu.memory_space<vmem>>, vector<1x8x1xf32>
      %143 = vector.shape_cast %142 : vector<1x8x1xf32> to vector<8x1xf32>
      %144 = vector.shape_cast %118 : vector<8x1xf32> to vector<1x8x1xf32>
      tpu.vector_store %arg7[%c2_95, %c0_96, %c0_97], %144 {strides = array<i32>} : memref<4x8x1xf32, #tpu.memory_space<vmem>>, vector<1x8x1xf32>,
      %c0_98 = arith.constant 0 : index
      %c0_99 = arith.constant 0 : index
      %c96 = arith.constant 96 : index
      %145 = vector.load %arg3[%c0_98, %c0_99, %c96] : memref<1x8x128xf32, #tpu.memory_space<vmem>>, vector<1x8x32xf32>
      %146 = vector.shape_cast %145 : vector<1x8x32xf32> to vector<8x32xf32>
      %cst_100 = arith.constant 0.176776692 : f32
      %147 = vector.broadcast %cst_100 : f32 to vector<8x32xf32>
      %148 = arith.mulf %146, %147 : vector<8x32xf32>
      %c0_101 = arith.constant 0 : index
      %c0_102 = arith.constant 0 : index
      %c96_103 = arith.constant 96 : index
      %149 = vector.load %arg4[%c0_101, %c0_102, %c96_103] : memref<1x8x128xf32, #tpu.memory_space<vmem>>, vector<1x8x32xf32>
      %150 = vector.shape_cast %149 : vector<1x8x32xf32> to vector<8x32xf32>
      %c0_104 = arith.constant 0 : index
      %c0_105 = arith.constant 0 : index
      %c96_106 = arith.constant 96 : index
      %151 = vector.load %arg5[%c0_104, %c0_105, %c96_106] : memref<1x8x128xf32, #tpu.memory_space<vmem>>, vector<1x8x32xf32>
      %152 = vector.shape_cast %151 : vector<1x8x32xf32> to vector<8x32xf32>
      %cst_107 = arith.constant dense<0.000000e+00> : vector<8x8xf32>
      %153 = tpu.matmul %148, %150, %cst_107 {dimension_numbers = #tpu.dot_dimension_numbers<[1], [1], [0], [0], [0, 0, 1, 0], [], []>} : vector<8x32xf32>, vector<8x32xf32>, vector<8x8xf32> -> vector<8x8xf32>
      %cst_108 = arith.constant -1.000000e+30 : f32
      %154 = vector.broadcast %cst_108 : f32 to vector<8x8xf32>
      %155 = arith.select %18, %153, %154 : vector<8x8xi1>, vector<8x8xf32>
      %c3 = arith.constant 3 : index
      %c0_109 = arith.constant 0 : index
      %c0_110 = arith.constant 0 : index
      %156 = vector.load %arg7[%c3, %c0_109, %c0_110] : memref<4x8x1xf32, #tpu.memory_space<vmem>>, vector<1x8x1xf32>
      %157 = vector.shape_cast %156 : vector<1x8x1xf32> to vector<8x1xf32>
      %cst_111 = arith.constant dense<0xFF800000> : vector<8xf32>
      %158 = vector.multi_reduction <maximumf>, %155, %cst_111 [1] : vector<8x8xf32> to vector<8xf32>
      %159 = vector.shape_cast %158 : vector<8xf32> to vector<8x1xf32>
      %160 = arith.maximumf %157, %159 : vector<8x1xf32>
      %161 = arith.subf %157, %160 : vector<8x1xf32>
      %162 = math.exp %161 : vector<8x1xf32>
      %163 = vector.broadcast %160 : vector<8x1xf32> to vector<8x8xf32>
      %164 = arith.subf %155, %163 : vector<8x8xf32>
      %165 = math.exp %164 : vector<8x8xf32>
      %c3_112 = arith.constant 3 : index
      %c0_113 = arith.constant 0 : index
      %c0_114 = arith.constant 0 : index
      %166 = vector.load %arg8[%c3_112, %c0_113, %c0_114] : memref<4x8x1xf32, #tpu.memory_space<vmem>>, vector<1x8x1xf32>
      %167 = vector.shape_cast %166 : vector<1x8x1xf32> to vector<8x1xf32>
      %168 = arith.mulf %162, %167 : vector<8x1xf32>
      %cst_115 = arith.constant dense<0.000000e+00> : vector<8xf32>
      %169 = vector.multi_reduction <add>, %165, %cst_115 [1] : vector<8x8xf32> to vector<8xf32>
      %170 = vector.shape_cast %169 : vector<8xf32> to vector<8x1xf32>
      %171 = arith.addf %168, %170 : vector<8x1xf32>
      %c3_116 = arith.constant 3 : index
      %c0_117 = arith.constant 0 : index
      %c0_118 = arith.constant 0 : index
      %172 = vector.load %arg8[%c3_116, %c0_117, %c0_118] : memref<4x8x1xf32, #tpu.memory_space<vmem>>, vector<1x8x1xf32>
      %173 = vector.shape_cast %172 : vector<1x8x1xf32> to vector<8x1xf32>
      %174 = vector.shape_cast %171 : vector<8x1xf32> to vector<1x8x1xf32>
      tpu.vector_store %arg8[%c3_116, %c0_117, %c0_118], %174 {strides = array<i32>} : memref<4x8x1xf32, #tpu.memory_space<vmem>>, vector<1x8x1xf32>,
      %c3_119 = arith.constant 3 : index
      %c0_120 = arith.constant 0 : index
      %c0_121 = arith.constant 0 : index
      %175 = vector.load %arg9[%c3_119, %c0_120, %c0_121] : memref<4x8x32xf32, #tpu.memory_space<vmem>>, vector<1x8x32xf32>
      %176 = vector.shape_cast %175 : vector<1x8x32xf32> to vector<8x32xf32>
      %177 = vector.broadcast %162 : vector<8x1xf32> to vector<8x32xf32>
      %178 = arith.mulf %177, %176 : vector<8x32xf32>
      %cst_122 = arith.constant dense<0.000000e+00> : vector<8x32xf32>
      %179 = tpu.matmul %165, %152, %cst_122 {dimension_numbers = #tpu.dot_dimension_numbers<[1], [0], [0], [1], [0, 0, 1, 1], [], []>} : vector<8x8xf32>, vector<8x32xf32>, vector<8x32xf32> -> vector<8x32xf32>
      %180 = arith.addf %178, %179 : vector<8x32xf32>
      %c3_123 = arith.constant 3 : index
      %c0_124 = arith.constant 0 : index
      %c0_125 = arith.constant 0 : index
      %181 = vector.load %arg9[%c3_123, %c0_124, %c0_125] : memref<4x8x32xf32, #tpu.memory_space<vmem>>, vector<1x8x32xf32>
      %182 = vector.shape_cast %181 : vector<1x8x32xf32> to vector<8x32xf32>
      %183 = vector.shape_cast %180 : vector<8x32xf32> to vector<1x8x32xf32>
      tpu.vector_store %arg9[%c3_123, %c0_124, %c0_125], %183 {strides = array<i32>} : memref<4x8x32xf32, #tpu.memory_space<vmem>>, vector<1x8x32xf32>,
      %c3_126 = arith.constant 3 : index
      %c0_127 = arith.constant 0 : index
      %c0_128 = arith.constant 0 : index
      %184 = vector.load %arg7[%c3_126, %c0_127, %c0_128] : memref<4x8x1xf32, #tpu.memory_space<vmem>>, vector<1x8x1xf32>
      %185 = vector.shape_cast %184 : vector<1x8x1xf32> to vector<8x1xf32>
      %186 = vector.shape_cast %160 : vector<8x1xf32> to vector<1x8x1xf32>
      tpu.vector_store %arg7[%c3_126, %c0_127, %c0_128], %186 {strides = array<i32>} : memref<4x8x1xf32, #tpu.memory_space<vmem>>, vector<1x8x1xf32>,
    } else {
    }
    %c0_i32_3 = arith.constant 0 : i32
    %9 = arith.cmpi eq, %arg2, %c0_i32_3 : i32
    %10 = arith.extui %9 : i1 to i32
    %c0_i32_4 = arith.constant 0 : i32
    %11 = arith.cmpi ne, %10, %c0_i32_4 : i32
    scf.if %11 {
      %c0 = arith.constant 0 : index
      %c0_5 = arith.constant 0 : index
      %c0_6 = arith.constant 0 : index
      %12 = vector.load %arg8[%c0, %c0_5, %c0_6] : memref<4x8x1xf32, #tpu.memory_space<vmem>>, vector<1x8x1xf32>
      %13 = vector.shape_cast %12 : vector<1x8x1xf32> to vector<8x1xf32>
      %14 = tpu.reciprocal %13 : vector<8x1xf32> -> vector<8x1xf32>
      %c0_7 = arith.constant 0 : index
      %c0_8 = arith.constant 0 : index
      %c0_9 = arith.constant 0 : index
      %15 = vector.load %arg9[%c0_7, %c0_8, %c0_9] : memref<4x8x32xf32, #tpu.memory_space<vmem>>, vector<1x8x32xf32>
      %16 = vector.shape_cast %15 : vector<1x8x32xf32> to vector<8x32xf32>
      %17 = vector.broadcast %14 : vector<8x1xf32> to vector<8x32xf32>
      %18 = arith.mulf %16, %17 : vector<8x32xf32>
      %c1 = arith.constant 1 : index
      %c0_10 = arith.constant 0 : index
      %c0_11 = arith.constant 0 : index
      %19 = vector.load %arg8[%c1, %c0_10, %c0_11] : memref<4x8x1xf32, #tpu.memory_space<vmem>>, vector<1x8x1xf32>
      %20 = vector.shape_cast %19 : vector<1x8x1xf32> to vector<8x1xf32>
      %21 = tpu.reciprocal %20 : vector<8x1xf32> -> vector<8x1xf32>
      %c1_12 = arith.constant 1 : index
      %c0_13 = arith.constant 0 : index
      %c0_14 = arith.constant 0 : index
      %22 = vector.load %arg9[%c1_12, %c0_13, %c0_14] : memref<4x8x32xf32, #tpu.memory_space<vmem>>, vector<1x8x32xf32>
      %23 = vector.shape_cast %22 : vector<1x8x32xf32> to vector<8x32xf32>
      %24 = vector.broadcast %21 : vector<8x1xf32> to vector<8x32xf32>
      %25 = arith.mulf %23, %24 : vector<8x32xf32>
      %c2 = arith.constant 2 : index
      %c0_15 = arith.constant 0 : index
      %c0_16 = arith.constant 0 : index
      %26 = vector.load %arg8[%c2, %c0_15, %c0_16] : memref<4x8x1xf32, #tpu.memory_space<vmem>>, vector<1x8x1xf32>
      %27 = vector.shape_cast %26 : vector<1x8x1xf32> to vector<8x1xf32>
      %28 = tpu.reciprocal %27 : vector<8x1xf32> -> vector<8x1xf32>
      %c2_17 = arith.constant 2 : index
      %c0_18 = arith.constant 0 : index
      %c0_19 = arith.constant 0 : index
      %29 = vector.load %arg9[%c2_17, %c0_18, %c0_19] : memref<4x8x32xf32, #tpu.memory_space<vmem>>, vector<1x8x32xf32>
      %30 = vector.shape_cast %29 : vector<1x8x32xf32> to vector<8x32xf32>
      %31 = vector.broadcast %28 : vector<8x1xf32> to vector<8x32xf32>
      %32 = arith.mulf %30, %31 : vector<8x32xf32>
      %c3 = arith.constant 3 : index
      %c0_20 = arith.constant 0 : index
      %c0_21 = arith.constant 0 : index
      %33 = vector.load %arg8[%c3, %c0_20, %c0_21] : memref<4x8x1xf32, #tpu.memory_space<vmem>>, vector<1x8x1xf32>
      %34 = vector.shape_cast %33 : vector<1x8x1xf32> to vector<8x1xf32>
      %35 = tpu.reciprocal %34 : vector<8x1xf32> -> vector<8x1xf32>
      %c3_22 = arith.constant 3 : index
      %c0_23 = arith.constant 0 : index
      %c0_24 = arith.constant 0 : index
      %36 = vector.load %arg9[%c3_22, %c0_23, %c0_24] : memref<4x8x32xf32, #tpu.memory_space<vmem>>, vector<1x8x32xf32>
      %37 = vector.shape_cast %36 : vector<1x8x32xf32> to vector<8x32xf32>
      %38 = vector.broadcast %35 : vector<8x1xf32> to vector<8x32xf32>
      %39 = arith.mulf %37, %38 : vector<8x32xf32>
      %40 = tpu.concatenate %18, %25, %32, %39 in 1 : vector<8x32xf32>, vector<8x32xf32>, vector<8x32xf32>, vector<8x32xf32> -> vector<8x128xf32>
      %c0_25 = arith.constant 0 : index
      %c0_26 = arith.constant 0 : index
      %c0_27 = arith.constant 0 : index
      %41 = vector.load %arg6[%c0_25, %c0_26, %c0_27] : memref<1x8x128xf32, #tpu.memory_space<vmem>>, vector<1x8x128xf32>
      %42 = vector.shape_cast %41 : vector<1x8x128xf32> to vector<8x128xf32>
      %43 = vector.shape_cast %40 : vector<8x128xf32> to vector<1x8x128xf32>
      tpu.vector_store %arg6[%c0_25, %c0_26, %c0_27], %43 {strides = array<i32>} : memref<1x8x128xf32, #tpu.memory_space<vmem>>, vector<1x8x128xf32>,
    } else {
    }
    return
  }
  func.func @transform_0(%arg0: i32, %arg1: i32, %arg2: i32) -> (i32, i32, i32) {
    %c0_i32 = arith.constant 0 : i32
    %c0_i32_0 = arith.constant 0 : i32
    return %arg0, %arg1, %c0_i32 : i32, i32, i32
  }
  func.func @transform_1(%arg0: i32, %arg1: i32, %arg2: i32) -> (i32, i32, i32) {
    %c0_i32 = arith.constant 0 : i32
    %c0_i32_0 = arith.constant 0 : i32
    return %arg0, %arg2, %c0_i32 : i32, i32, i32
  }
  func.func @transform_2(%arg0: i32, %arg1: i32, %arg2: i32) -> (i32, i32, i32) {
    %c0_i32 = arith.constant 0 : i32
    %c0_i32_0 = arith.constant 0 : i32
    return %arg0, %arg2, %c0_i32 : i32, i32, i32
  }
  func.func @transform_3(%arg0: i32, %arg1: i32, %arg2: i32) -> (i32, i32, i32) {
    %c0_i32 = arith.constant 0 : i32
    %c0_i32_0 = arith.constant 0 : i32
    return %arg0, %arg1, %c0_i32 : i32, i32, i32
  }
}

</mosaic_0001>

<llo_original>
// kernel: tpu_custom_call.1
$region0: #{tpu_custom_call.1}
  #allocation0 [shape = 'u32[]', space=smem, size = 0x4, offset = 0x4, fixed_abs, tag = 'smem constant byte address 0x4 - core index']
  #allocation1 [shape = 'u32[72,128]{1,0:T(1,128)}', space=vmem, size = 0x9000, scoped, tag = 'internal scratch']
  #allocation2 [shape = 'f32[4,8,1]{2,1,0:T(8,128)}', space=vmem, size = 0x4000, scoped, tag = 'scratch operand']
  #allocation3 [shape = 'f32[4,8,1]{2,1,0:T(8,128)}', space=vmem, size = 0x4000, scoped, tag = 'scratch operand']
  #allocation4 [shape = 'f32[4,8,32]{2,1,0:T(8,128)}', space=vmem, size = 0x4000, scoped, tag = 'scratch operand']
  %s0 = inlined_call_operand.hbm [shape: f32[2,8,128], index: 0, kind: input, shape index: {}]
  %s1 = inlined_call_operand.hbm [shape: f32[2,8,128], index: 1, kind: input, shape index: {}]
  %s2 = inlined_call_operand.hbm [shape: f32[2,8,128], index: 2, kind: input, shape index: {}]
  %s3 = inlined_call_operand.hbm [shape: f32[2,8,128], index: 3, kind: output, shape index: {}]
  %s4 = sld [smem:[#allocation0]]
  $region69: #{tpu_custom_call.1} parent=0
    _
  %s6 = ssub.s32 1, %s4
  %s7 = scalar_select 0, %s6, %s4
  $region1: #{tpu_custom_call.1} parent=0
    #allocation5 [shape = 'u8[8192]{0}', space=vmem, size = 0x2000, scoped, tag = 'input window, operand 0']
    #allocation6 [shape = 's32[2]{0}', space=sflag, size = 0x8, scoped, tag = 'scoped memory for tpu_custom_call.1']
    #allocation7 [shape = 's32[2]{0}', space=sflag, size = 0x8, scoped, tag = 'scoped memory for tpu_custom_call.1']
    #allocation8 [shape = 'u8[8192]{0}', space=vmem, size = 0x2000, scoped, tag = 'input window, operand 1']
    #allocation9 [shape = 's32[2]{0}', space=sflag, size = 0x8, scoped, tag = 'scoped memory for tpu_custom_call.1']
    #allocation10 [shape = 'u8[8192]{0}', space=vmem, size = 0x2000, scoped, tag = 'input window, operand 2']
    #allocation11 [shape = 'u8[8192]{0}', space=vmem, size = 0x2000, scoped, tag = 'output window, operand 0']
    %8 = vsyncpa [#allocation6], 0
    %s9 = scalar_lea.sflag [#allocation6], 1
    %10 = vsyncpa %s9, 0
    %11 = vsyncpa [#allocation9], 0
    %s12 = scalar_lea.sflag [#allocation9], 1
    %13 = vsyncpa %s12, 0
    %14 = vsyncpa [#allocation7], 0
    %s15 = scalar_lea.sflag [#allocation7], 1
    %16 = vsyncpa %s15, 0
    loop: start=0, step=1, limit=4
    $region2: #{tpu_custom_call.1} parent=1 // loop_pre_header
      _
    $region3: #{tpu_custom_call.1} parent=1 // loop_header
      %s18 = sphi 0, %s22
      %p19 = scmp.ge.s32.totalorder %s18, 4
      %s25 = sphi 0, %s44
      %s26 = sphi 0, %s40
      %s27 = sphi 0, %s36
      %s28 = sphi 0, %s25
      %s29 = sphi 0, %s26
      %s30 = sphi 0, %s27
      %s31 = sphi 0, %s28
      %s32 = sphi 0, %s29
      %s33 = sphi 0, %s30
      %s49 = sphi 0, %s51
      %s52 = sphi 0, %s49
      %s53 = sphi 0, %s52
      %s69 = sphi 0, %s53
      %s77 = sphi 0, %s79
      %s80 = sphi 0, %s77
      %s81 = sphi 0, %s80
      %s97 = sphi 0, %s81
      %s105 = sphi 0, %s107
      %s108 = sphi 0, %s105
      %s109 = sphi 0, %s108
      %s125 = sphi 0, %s109
      %s133 = sphi 0, %s135
      %s136 = sphi 0, %s133
      %s137 = sphi 0, %s136
      %s153 = sphi 0, %s137
    $region4: #{tpu_custom_call.1} parent=1 // loop_header_branch
      %21 = sbr.rel (%p19) target = $region8
    $region5: #{tpu_custom_call.1} parent=1 // loop_body
      %s23 = ssub.s32 %s18, 1
      %s24 = ssub.s32 %s18, 2
      %s34 = sadd.s32 1, %s27
      %p35 = scmp.ge.s32.totalorder %s34, 1
      %s36 = scalar_select %p35, 0, %s34
      %s37 = sadd.s32 1, %s26
      %s38 = scalar_select %p35, %s37, %s26
      %p39 = scmp.ge.s32.totalorder %s38, 1
      %s40 = scalar_select %p39, 0, %s38
      %s41 = sadd.s32 1, %s25
      %s42 = scalar_select %p39, %s41, %s25
      %p43 = scmp.ge.s32.totalorder %s42, 2
      %s44 = scalar_select %p43, 0, %s42
      %s45 = ssub.s32 %s25, %s44
      %s46 = ssub.s32 %s26, %s40
      %s47 = sor.u32 %s45, %s46
      %p48 = scmp.eq.s32.totalorder %s47, 0
      %s50 = sadd.s32 %s49, 1
      %s51 = scalar_select %p48, %s49, %s50
      %p54 = pneg %p48
      %p55 = scmp.eq.s32.totalorder %s18, 1
      %p56 = por %p54, %p55
      %p57 = scmp.ne.s32.totalorder %s49, %s52
      %p58 = scmp.eq.s32.totalorder %s18, 0
      %p59 = por %p57, %p58
      %p60 = scmp.ne.s32.totalorder %s49, %s52
      %p61 = scmp.eq.s32.totalorder %s23, 1
      %p62 = por %p60, %p61
      %p63 = scmp.ne.s32.totalorder %s52, %s53
      %p64 = scmp.eq.s32.totalorder %s23, 0
      %p65 = por %p63, %p64
      %p66 = scmp.ne.s32.totalorder %s52, %s53
      %p67 = scmp.eq.s32.totalorder %s24, 1
      %p68 = por %p66, %p67
      %p70 = scmp.ne.s32.totalorder %s53, %s69
      %p71 = scmp.eq.s32.totalorder %s24, 0
      %p72 = por %p70, %p71
      %s73 = ssub.s32 %s25, %s44
      %s74 = ssub.s32 %s27, %s36
      %s75 = sor.u32 %s73, %s74
      %p76 = scmp.eq.s32.totalorder %s75, 0
      %s78 = sadd.s32 %s77, 1
      %s79 = scalar_select %p76, %s77, %s78
      %p82 = pneg %p76
      %p83 = scmp.eq.s32.totalorder %s18, 1
      %p84 = por %p82, %p83
      %p85 = scmp.ne.s32.totalorder %s77, %s80
      %p86 = scmp.eq.s32.totalorder %s18, 0
      %p87 = por %p85, %p86
      %p88 = scmp.ne.s32.totalorder %s77, %s80
      %p89 = scmp.eq.s32.totalorder %s23, 1
      %p90 = por %p88, %p89
      %p91 = scmp.ne.s32.totalorder %s80, %s81
      %p92 = scmp.eq.s32.totalorder %s23, 0
      %p93 = por %p91, %p92
      %p94 = scmp.ne.s32.totalorder %s80, %s81
      %p95 = scmp.eq.s32.totalorder %s24, 1
      %p96 = por %p94, %p95
      %p98 = scmp.ne.s32.totalorder %s81, %s97
      %p99 = scmp.eq.s32.totalorder %s24, 0
      %p100 = por %p98, %p99
      %s101 = ssub.s32 %s25, %s44
      %s102 = ssub.s32 %s27, %s36
      %s103 = sor.u32 %s101, %s102
      %p104 = scmp.eq.s32.totalorder %s103, 0
      %s106 = sadd.s32 %s105, 1
      %s107 = scalar_select %p104, %s105, %s106
      %p110 = pneg %p104
      %p111 = scmp.eq.s32.totalorder %s18, 1
      %p112 = por %p110, %p111
      %p113 = scmp.ne.s32.totalorder %s105, %s108
      %p114 = scmp.eq.s32.totalorder %s18, 0
      %p115 = por %p113, %p114
      %p116 = scmp.ne.s32.totalorder %s105, %s108
      %p117 = scmp.eq.s32.totalorder %s23, 1
      %p118 = por %p116, %p117
      %p119 = scmp.ne.s32.totalorder %s108, %s109
      %p120 = scmp.eq.s32.totalorder %s23, 0
      %p121 = por %p119, %p120
      %p122 = scmp.ne.s32.totalorder %s108, %s109
      %p123 = scmp.eq.s32.totalorder %s24, 1
      %p124 = por %p122, %p123
      %p126 = scmp.ne.s32.totalorder %s109, %s125
      %p127 = scmp.eq.s32.totalorder %s24, 0
      %p128 = por %p126, %p127
      %s129 = ssub.s32 %s25, %s44
      %s130 = ssub.s32 %s26, %s40
      %s131 = sor.u32 %s129, %s130
      %p132 = scmp.eq.s32.totalorder %s131, 0
      %s134 = sadd.s32 %s133, 1
      %s135 = scalar_select %p132, %s133, %s134
      %p138 = pneg %p132
      %p139 = scmp.eq.s32.totalorder %s18, 1
      %p140 = por %p138, %p139
      %p141 = scmp.ne.s32.totalorder %s133, %s136
      %p142 = scmp.eq.s32.totalorder %s18, 0
      %p143 = por %p141, %p142
      %p144 = scmp.ne.s32.totalorder %s133, %s136
      %p145 = scmp.eq.s32.totalorder %s23, 1
      %p146 = por %p144, %p145
      %p147 = scmp.ne.s32.totalorder %s136, %s137
      %p148 = scmp.eq.s32.totalorder %s23, 0
      %p149 = por %p147, %p148
      %p150 = scmp.ne.s32.totalorder %s136, %s137
      %p151 = scmp.eq.s32.totalorder %s24, 1
      %p152 = por %p150, %p151
      %p154 = scmp.ne.s32.totalorder %s137, %s153
      %p155 = scmp.eq.s32.totalorder %s24, 0
      %p156 = por %p154, %p155
      %p157 = scmp.le.s32.totalorder 1, %s18
      %p158 = scmp.lt.s32.totalorder %s18, 3
      %p159 = pnand %p157, %p158
      %p160 = pneg %p159
      // Predicated region
      $region9: #{tpu_custom_call.1} parent=5 // pred_check
        _
      $region10: #{tpu_custom_call.1} parent=5 // pred_check_branch
        %162 = sbr.rel (%p159) target = $region12
      $region11: #{tpu_custom_call.1} parent=5 // pred_region
        %s163 = ssub.s32 %s18, 1
      $region12: #{tpu_custom_call.1} parent=5 // pred_fallthru
        _
      %p164 = scmp.lt.s32.totalorder %s18, 2
      // Predicated region
      $region13: #{tpu_custom_call.1} parent=5 // pred_check
        %p165 = pneg %p164
      $region14: #{tpu_custom_call.1} parent=5 // pred_check_branch
        %167 = sbr.rel (%p165) target = $region16
      $region15: #{tpu_custom_call.1} parent=5 // pred_region
        // Predicated region
        $region17: #{tpu_custom_call.1} parent=15 // pred_check
          %p168 = pneg %p59
        $region18: #{tpu_custom_call.1} parent=15 // pred_check_branch
          %170 = sbr.rel (%p168) target = $region20
        $region19: #{tpu_custom_call.1} parent=15 // pred_region
          %s171 = sand.u32 %s49, 1
          %s172 = scalar_lea.sflag [#allocation6], %s171
          %s173 = sand.u32 %s49, 1
          %s174 = smul.addr %s173, 8
          %s175 = scalar_lea.vmem [#allocation5], %s174
          %177 = vsyncadd %s172, 0
          %s178 = sadd.s32 %s26, %s25
          %s179 = smul.addr %s178, 8
          %s180 = scalar_lea.hbm %s0, %s179
          %s182 = sshll.u32 %s180, 4
          %s183 = int_to_ptr.hbm [resolvable:$true] %s182
          %s184 = sshll.u32 %s175, 4
          %s185 = int_to_ptr.vmem [resolvable:$true] %s184
          %187 = dma.hbm_to_vmem [thread:$0]  %s183, 128, %s185, %s172
        $region20: #{tpu_custom_call.1} parent=15 // pred_fallthru
          _
        // Predicated region
        $region21: #{tpu_custom_call.1} parent=15 // pred_check
          %p188 = pneg %p87
        $region22: #{tpu_custom_call.1} parent=15 // pred_check_branch
          %190 = sbr.rel (%p188) target = $region24
        $region23: #{tpu_custom_call.1} parent=15 // pred_region
          %s191 = sand.u32 %s18, 1
          %s192 = scalar_lea.sflag [#allocation9], %s191
          %s193 = sand.u32 %s77, 1
          %s194 = smul.addr %s193, 8
          %s195 = scalar_lea.vmem [#allocation8], %s194
          %197 = vsyncadd %s192, 0
          %s198 = sadd.s32 %s27, %s25
          %s199 = smul.addr %s198, 8
          %s200 = scalar_lea.hbm %s1, %s199
          %s202 = sshll.u32 %s200, 4
          %s203 = int_to_ptr.hbm [resolvable:$true] %s202
          %s204 = sshll.u32 %s195, 4
          %s205 = int_to_ptr.vmem [resolvable:$true] %s204
          %207 = dma.hbm_to_vmem [thread:$0]  %s203, 128, %s205, %s192
        $region24: #{tpu_custom_call.1} parent=15 // pred_fallthru
          _
        // Predicated region
        $region25: #{tpu_custom_call.1} parent=15 // pred_check
          %p208 = pneg %p115
        $region26: #{tpu_custom_call.1} parent=15 // pred_check_branch
          %210 = sbr.rel (%p208) target = $region28
        $region27: #{tpu_custom_call.1} parent=15 // pred_region
          %s211 = sand.u32 %s18, 1
          %s212 = scalar_lea.sflag [#allocation9], %s211
          %s213 = sand.u32 %s105, 1
          %s214 = smul.addr %s213, 8
          %s215 = scalar_lea.vmem [#allocation10], %s214
          %217 = vsyncadd %s212, 0
          %s218 = sadd.s32 %s27, %s25
          %s219 = smul.addr %s218, 8
          %s220 = scalar_lea.hbm %s2, %s219
          %s222 = sshll.u32 %s220, 4
          %s223 = int_to_ptr.hbm [resolvable:$true] %s222
          %s224 = sshll.u32 %s215, 4
          %s225 = int_to_ptr.vmem [resolvable:$true] %s224
          %227 = dma.hbm_to_vmem [thread:$0]  %s223, 128, %s225, %s212
        $region28: #{tpu_custom_call.1} parent=15 // pred_fallthru
          _
      $region16: #{tpu_custom_call.1} parent=5 // pred_fallthru
        _
      %p228 = scmp.le.s32.totalorder 1, %s18
      %p229 = scmp.lt.s32.totalorder %s18, 3
      %p230 = pnand %p228, %p229
      %p231 = pneg %p230
      // Predicated region
      $region29: #{tpu_custom_call.1} parent=5 // pred_check
        _
      $region30: #{tpu_custom_call.1} parent=5 // pred_check_branch
        %233 = sbr.rel (%p230) target = $region32
      $region31: #{tpu_custom_call.1} parent=5 // pred_region
        %s234 = ssub.s32 %s18, 1
        %s235 = sand.u32 %s52, 1
        %s236 = scalar_lea.sflag [#allocation6], %s235
        %s237 = sand.u32 %s52, 1
        %s238 = smul.addr %s237, 8
        %s239 = scalar_lea.vmem [#allocation5], %s238
        // Predicated region
        $region33: #{tpu_custom_call.1} parent=31 // pred_check
          %p240 = pneg %p65
        $region34: #{tpu_custom_call.1} parent=31 // pred_check_branch
          %242 = sbr.rel (%p240) target = $region36
        $region35: #{tpu_custom_call.1} parent=31 // pred_region
          %244 = dma.done %s236, 128
        $region36: #{tpu_custom_call.1} parent=31 // pred_fallthru
          _
        %s245 = sand.u32 %s23, 1
        %s246 = scalar_lea.sflag [#allocation9], %s245
        %s247 = sand.u32 %s80, 1
        %s248 = smul.addr %s247, 8
        %s249 = scalar_lea.vmem [#allocation8], %s248
        // Predicated region
        $region37: #{tpu_custom_call.1} parent=31 // pred_check
          %p250 = pneg %p93
        $region38: #{tpu_custom_call.1} parent=31 // pred_check_branch
          %252 = sbr.rel (%p250) target = $region40
        $region39: #{tpu_custom_call.1} parent=31 // pred_region
          %254 = dma.done %s246, 128
        $region40: #{tpu_custom_call.1} parent=31 // pred_fallthru
          _
        %s255 = sand.u32 %s23, 1
        %s256 = scalar_lea.sflag [#allocation9], %s255
        %s257 = sand.u32 %s108, 1
        %s258 = smul.addr %s257, 8
        %s259 = scalar_lea.vmem [#allocation10], %s258
        // Predicated region
        $region41: #{tpu_custom_call.1} parent=31 // pred_check
          %p260 = pneg %p121
        $region42: #{tpu_custom_call.1} parent=31 // pred_check_branch
          %262 = sbr.rel (%p260) target = $region44
        $region43: #{tpu_custom_call.1} parent=31 // pred_region
          %264 = dma.done %s256, 128
        $region44: #{tpu_custom_call.1} parent=31 // pred_fallthru
          _
        %s265 = sand.u32 %s52, 1
        %s266 = scalar_lea.sflag [#allocation6], %s265
        %s267 = sand.u32 %s52, 1
        %s268 = smul.addr %s267, 8
        %s269 = scalar_lea.vmem [#allocation5], %s268
        %p270 = pneg %p65
        %p271 = pneg %p62
        %s272 = sand.u32 %s23, 1
        %s273 = scalar_lea.sflag [#allocation9], %s272
        %s274 = sand.u32 %s80, 1
        %s275 = smul.addr %s274, 8
        %s276 = scalar_lea.vmem [#allocation8], %s275
        %p277 = pneg %p93
        %p278 = pneg %p90
        %s279 = sand.u32 %s23, 1
        %s280 = scalar_lea.sflag [#allocation9], %s279
        %s281 = sand.u32 %s108, 1
        %s282 = smul.addr %s281, 8
        %s283 = scalar_lea.vmem [#allocation10], %s282
        %p284 = pneg %p121
        %p285 = pneg %p118
        %p286 = pneg %p149
        %p287 = pneg %p146
        %s288 = sand.u32 %s136, 1
        %s289 = scalar_lea.sflag [#allocation7], %s288
        %s290 = sand.u32 %s136, 1
        %s291 = smul.addr %s290, 8
        %s292 = scalar_lea.vmem [#allocation11], %s291
        %p293 = scmp.eq.s32.totalorder %s30, 0
        // Predicated region
        $region45: #{tpu_custom_call.1} parent=31 // pred_check
          %p294 = pneg %p293
        $region46: #{tpu_custom_call.1} parent=31 // pred_check_branch
          %296 = sbr.rel (%p294) target = $region48
        $region47: #{tpu_custom_call.1} parent=31 // pred_region
          %vm297 = vcmask 7168
          %298 = vst.msk [vmem:[#allocation2] sm:$0xff] %vm297, -1e+30
          %299 = vst.msk [vmem:[#allocation2 + $0x8] sm:$0xff] %vm297, -1e+30
          %300 = vst.msk [vmem:[#allocation2 + $0x10] sm:$0xff] %vm297, -1e+30
          %301 = vst.msk [vmem:[#allocation2 + $0x18] sm:$0xff] %vm297, -1e+30
          %302 = vst.msk [vmem:[#allocation3] sm:$0xff] %vm297, 0.0
          %303 = vst.msk [vmem:[#allocation3 + $0x8] sm:$0xff] %vm297, 0.0
          %304 = vst.msk [vmem:[#allocation3 + $0x10] sm:$0xff] %vm297, 0.0
          %305 = vst.msk [vmem:[#allocation3 + $0x18] sm:$0xff] %vm297, 0.0
          %vm306 = vcmask 261120
          %307 = vst.msk [vmem:[#allocation4] sm:$0xff] %vm306, 0.0
          %308 = vst.msk [vmem:[#allocation4 + $0x8] sm:$0xff] %vm306, 0.0
          %309 = vst.msk [vmem:[#allocation4 + $0x10] sm:$0xff] %vm306, 0.0
          %310 = vst.msk [vmem:[#allocation4 + $0x18] sm:$0xff] %vm306, 0.0
        $region48: #{tpu_custom_call.1} parent=31 // pred_fallthru
          _
        %s311 = smul.u32 %s29, 8
        %s312 = smul.u32 %s30, 8
        %s313 = sadd.s32 %s311, 7
        %p314 = scmp.le.s32.totalorder %s312, %s313
        // Predicated region
        $region49: #{tpu_custom_call.1} parent=31 // pred_check
          %p315 = pneg %p314
        $region50: #{tpu_custom_call.1} parent=31 // pred_check_branch
          %317 = sbr.rel (%p315) target = $region52
        $region51: #{tpu_custom_call.1} parent=31 // pred_region
          %v318 = vlaneseq
          %v319 = vshrl.u32 %v318, 7
          %v320 = vstv %s311
          %v321 = vadd.s32 %v319, %v320
          %v322 = vlaneseq
          %v323 = vand.u32 %v322, 127
          %v324 = vstv %s312
          %v325 = vadd.s32 %v323, %v324
          %vm326 = vcmp.le.s32.totalorder %v325, %v321
          %v327 = vld [vmem:[%s239] sm:$0xff]
          %v328 = vmul.f32 %v327, 0.17677669
          %v329 = vld [vmem:[%s249] sm:$0xff]
          %v330 = vld [vmem:[%s259] sm:$0xff]
          %vm331 = vcmask 261120
          %v333 = vsel %vm331, %v328, 0
          %v336 = vsel %vm331, %v329, 0
          %338 = vmatpush.xpose.msra.mxu0 0.0
          %339 = vmatpush.xpose.msra.mxu0 0.0
          %340 = vmatpush.xpose.msra.mxu0 0.0
          %341 = vmatpush.xpose.msra.mxu0 0.0
          %342 = vmatpush.xpose.msra.mxu0 0.0
          %343 = vmatpush.xpose.msra.mxu0 0.0
          %344 = vmatpush.xpose.msra.mxu0 0.0
          %345 = vmatpush.xpose.msra.mxu0 0.0
          %346 = vmatpush.xpose.msra.mxu0 0.0
          %347 = vmatpush.xpose.msra.mxu0 0.0
          %348 = vmatpush.xpose.msra.mxu0 0.0
          %349 = vmatpush.xpose.msra.mxu0 0.0
          %350 = vmatpush.xpose.msra.mxu0 0.0
          %351 = vmatpush.xpose.msra.mxu0 0.0
          %352 = vmatpush.xpose.msra.mxu0 0.0
          %353 = vmatpush.xpose.msra.mxu0 %v336
          %354 = vmatmul.f32.gmra.mxu0 %v333
          %v355 = vpop.f32.mrf.mxu0
          %v356 = vadd.f32 0.0, %v355
          %357 = vdwg.mxu0
          %v358 = vsel %vm326, %v356, -1e+30
          %v359 = vld [vmem:[#allocation2] sm:$0xff]
          %vm360 = vcmask 64512
          %v361 = vsel %vm360, %v358, -inf
          %362 = vmax.xlane.f32.xlu0 %v361
          %v363 = vpop.xlane.xlu0 %362
          %v364 = vmax.f32 %v359, %v363
          %v365 = vsub.f32 %v359, %v364
          %v366 = vmul.f32 %v365, 1.442695
          %v367 = vpow.pop %v366
          %369 = vset.pattern.permute.xlu0 0
          %370 = vperm.xlu0 %369, %v364
          %v371 = vpop.permute.xlu0 %370
          %v373 = vsub.f32 %v358, %v371
          %v374 = vmul.f32 %v373, 1.442695
          %v375 = vpow.pop %v374
          %v376 = vld [vmem:[#allocation3] sm:$0xff]
          %v377 = vmul.f32 %v367, %v376
          %v378 = vsel %vm360, %v375, 0.0
          %379 = vadd.xlane.f32.xlu0 %v378
          %v380 = vpop.xlane.xlu0 %379
          %v381 = vadd.f32 %v377, %v380
          %vm382 = vcmask 7168
          %383 = vst.msk [vmem:[#allocation3] sm:$0xff] %vm382, %v381
          %v384 = vld [vmem:[#allocation4] sm:$0xff]
          %386 = vset.pattern.permute.xlu0 0
          %387 = vperm.xlu0 %386, %v367
          %v388 = vpop.permute.xlu0 %387
          %v390 = vmul.f32 %v388, %v384
          %v392 = vsel %vm360, %v375, 0
          %394 = vmatpush.msra.mxu0 0.0
          %395 = vmatpush.msra.mxu0 0.0
          %396 = vmatpush.msra.mxu0 0.0
          %397 = vmatpush.msra.mxu0 0.0
          %398 = vmatpush.msra.mxu0 0.0
          %399 = vmatpush.msra.mxu0 0.0
          %400 = vmatpush.msra.mxu0 0.0
          %401 = vmatpush.msra.mxu0 0.0
          %402 = vmatpush.msra.mxu0 0.0
          %403 = vmatpush.msra.mxu0 0.0
          %404 = vmatpush.msra.mxu0 0.0
          %405 = vmatpush.msra.mxu0 0.0
          %406 = vmatpush.msra.mxu0 0.0
          %407 = vmatpush.msra.mxu0 0.0
          %408 = vmatpush.msra.mxu0 0.0
          %409 = vmatpush.msra.mxu0 %v330
          %410 = vmatmul.f32.gmra.mxu0 %v392
          %v411 = vpop.f32.mrf.mxu0
          %v412 = vadd.f32 0.0, %v411
          %413 = vdwg.mxu0
          %v414 = vadd.f32 %v390, %v412
          %415 = vst.msk [vmem:[#allocation4] sm:$0xff] %vm331, %v414
          %416 = vst.msk [vmem:[#allocation2] sm:$0xff] %vm382, %v364
          %v417 = vld [vmem:[%s239] sm:$0xff]
          %v418 = vmul.f32 %v417, 0.17677669
          %v419 = vld [vmem:[%s249] sm:$0xff]
          %v420 = vld [vmem:[%s259] sm:$0xff]
          %422 = vrot.lane.b32.xlu0 %v418, 96
          %v423 = vpop.permute.xlu0 %422
          %425 = vrot.lane.b32.xlu0 %v419, 96
          %v426 = vpop.permute.xlu0 %425
          %v427 = vsel %vm331, %v423, 0
          %v429 = vsel %vm331, %v426, 0
          %431 = vmatpush.xpose.msra.mxu0 0.0
          %432 = vmatpush.xpose.msra.mxu0 0.0
          %433 = vmatpush.xpose.msra.mxu0 0.0
          %434 = vmatpush.xpose.msra.mxu0 0.0
          %435 = vmatpush.xpose.msra.mxu0 0.0
          %436 = vmatpush.xpose.msra.mxu0 0.0
          %437 = vmatpush.xpose.msra.mxu0 0.0
          %438 = vmatpush.xpose.msra.mxu0 0.0
          %439 = vmatpush.xpose.msra.mxu0 0.0
          %440 = vmatpush.xpose.msra.mxu0 0.0
          %441 = vmatpush.xpose.msra.mxu0 0.0
          %442 = vmatpush.xpose.msra.mxu0 0.0
          %443 = vmatpush.xpose.msra.mxu0 0.0
          %444 = vmatpush.xpose.msra.mxu0 0.0
          %445 = vmatpush.xpose.msra.mxu0 0.0
          %446 = vmatpush.xpose.msra.mxu0 %v429
          %447 = vmatmul.f32.gmra.mxu0 %v427
          %v448 = vpop.f32.mrf.mxu0
          %v449 = vadd.f32 0.0, %v448
          %450 = vdwg.mxu0
          %v451 = vsel %vm326, %v449, -1e+30
          %s452 = scalar_lea.vmem [#allocation2], 8
          %v453 = vld [vmem:[%s452] sm:$0xff]
          %v454 = vsel %vm360, %v451, -inf
          %455 = vmax.xlane.f32.xlu0 %v454
          %v456 = vpop.xlane.xlu0 %455
          %v457 = vmax.f32 %v453, %v456
          %v458 = vsub.f32 %v453, %v457
          %v459 = vmul.f32 %v458, 1.442695
          %v460 = vpow.pop %v459
          %462 = vset.pattern.permute.xlu0 0
          %463 = vperm.xlu0 %462, %v457
          %v464 = vpop.permute.xlu0 %463
          %v466 = vsub.f32 %v451, %v464
          %v467 = vmul.f32 %v466, 1.442695
          %v468 = vpow.pop %v467
          %s469 = scalar_lea.vmem [#allocation3], 8
          %v470 = vld [vmem:[%s469] sm:$0xff]
          %v471 = vmul.f32 %v460, %v470
          %v472 = vsel %vm360, %v468, 0.0
          %473 = vadd.xlane.f32.xlu0 %v472
          %v474 = vpop.xlane.xlu0 %473
          %v475 = vadd.f32 %v471, %v474
          %476 = vst.msk [vmem:[%s469] sm:$0xff] %vm382, %v475
          %s477 = scalar_lea.vmem [#allocation4], 8
          %v478 = vld [vmem:[%s477] sm:$0xff]
          %480 = vset.pattern.permute.xlu0 0
          %481 = vperm.xlu0 %480, %v460
          %v482 = vpop.permute.xlu0 %481
          %v484 = vmul.f32 %v482, %v478
          %486 = vrot.lane.b32.xlu0 %v420, 96
          %v487 = vpop.permute.xlu0 %486
          %v490 = vsel %vm360, %v468, 0
          %492 = vmatpush.msra.mxu0 0.0
          %493 = vmatpush.msra.mxu0 0.0
          %494 = vmatpush.msra.mxu0 0.0
          %495 = vmatpush.msra.mxu0 0.0
          %496 = vmatpush.msra.mxu0 0.0
          %497 = vmatpush.msra.mxu0 0.0
          %498 = vmatpush.msra.mxu0 0.0
          %499 = vmatpush.msra.mxu0 0.0
          %500 = vmatpush.msra.mxu0 0.0
          %501 = vmatpush.msra.mxu0 0.0
          %502 = vmatpush.msra.mxu0 0.0
          %503 = vmatpush.msra.mxu0 0.0
          %504 = vmatpush.msra.mxu0 0.0
          %505 = vmatpush.msra.mxu0 0.0
          %506 = vmatpush.msra.mxu0 0.0
          %507 = vmatpush.msra.mxu0 %v487
          %508 = vmatmul.f32.gmra.mxu0 %v490
          %v509 = vpop.f32.mrf.mxu0
          %v510 = vadd.f32 0.0, %v509
          %511 = vdwg.mxu0
          %v512 = vadd.f32 %v484, %v510
          %513 = vst.msk [vmem:[%s477] sm:$0xff] %vm331, %v512
          %514 = vst.msk [vmem:[%s452] sm:$0xff] %vm382, %v457
          %v515 = vld [vmem:[%s239] sm:$0xff]
          %v516 = vmul.f32 %v515, 0.17677669
          %v517 = vld [vmem:[%s249] sm:$0xff]
          %v518 = vld [vmem:[%s259] sm:$0xff]
          %520 = vrot.lane.b32.xlu0 %v516, 64
          %v521 = vpop.permute.xlu0 %520
          %523 = vrot.lane.b32.xlu0 %v517, 64
          %v524 = vpop.permute.xlu0 %523
          %v525 = vsel %vm331, %v521, 0
          %v527 = vsel %vm331, %v524, 0
          %529 = vmatpush.xpose.msra.mxu0 0.0
          %530 = vmatpush.xpose.msra.mxu0 0.0
          %531 = vmatpush.xpose.msra.mxu0 0.0
          %532 = vmatpush.xpose.msra.mxu0 0.0
          %533 = vmatpush.xpose.msra.mxu0 0.0
          %534 = vmatpush.xpose.msra.mxu0 0.0
          %535 = vmatpush.xpose.msra.mxu0 0.0
          %536 = vmatpush.xpose.msra.mxu0 0.0
          %537 = vmatpush.xpose.msra.mxu0 0.0
          %538 = vmatpush.xpose.msra.mxu0 0.0
          %539 = vmatpush.xpose.msra.mxu0 0.0
          %540 = vmatpush.xpose.msra.mxu0 0.0
          %541 = vmatpush.xpose.msra.mxu0 0.0
          %542 = vmatpush.xpose.msra.mxu0 0.0
          %543 = vmatpush.xpose.msra.mxu0 0.0
          %544 = vmatpush.xpose.msra.mxu0 %v527
          %545 = vmatmul.f32.gmra.mxu0 %v525
          %v546 = vpop.f32.mrf.mxu0
          %v547 = vadd.f32 0.0, %v546
          %548 = vdwg.mxu0
          %v549 = vsel %vm326, %v547, -1e+30
          %s550 = scalar_lea.vmem [#allocation2], 16
          %v551 = vld [vmem:[%s550] sm:$0xff]
          %v552 = vsel %vm360, %v549, -inf
          %553 = vmax.xlane.f32.xlu0 %v552
          %v554 = vpop.xlane.xlu0 %553
          %v555 = vmax.f32 %v551, %v554
          %v556 = vsub.f32 %v551, %v555
          %v557 = vmul.f32 %v556, 1.442695
          %v558 = vpow.pop %v557
          %560 = vset.pattern.permute.xlu0 0
          %561 = vperm.xlu0 %560, %v555
          %v562 = vpop.permute.xlu0 %561
          %v564 = vsub.f32 %v549, %v562
          %v565 = vmul.f32 %v564, 1.442695
          %v566 = vpow.pop %v565
          %s567 = scalar_lea.vmem [#allocation3], 16
          %v568 = vld [vmem:[%s567] sm:$0xff]
          %v569 = vmul.f32 %v558, %v568
          %v570 = vsel %vm360, %v566, 0.0
          %571 = vadd.xlane.f32.xlu0 %v570
          %v572 = vpop.xlane.xlu0 %571
          %v573 = vadd.f32 %v569, %v572
          %574 = vst.msk [vmem:[%s567] sm:$0xff] %vm382, %v573
          %s575 = scalar_lea.vmem [#allocation4], 16
          %v576 = vld [vmem:[%s575] sm:$0xff]
          %578 = vset.pattern.permute.xlu0 0
          %579 = vperm.xlu0 %578, %v558
          %v580 = vpop.permute.xlu0 %579
          %v582 = vmul.f32 %v580, %v576
          %584 = vrot.lane.b32.xlu0 %v518, 64
          %v585 = vpop.permute.xlu0 %584
          %v588 = vsel %vm360, %v566, 0
          %590 = vmatpush.msra.mxu0 0.0
          %591 = vmatpush.msra.mxu0 0.0
          %592 = vmatpush.msra.mxu0 0.0
          %593 = vmatpush.msra.mxu0 0.0
          %594 = vmatpush.msra.mxu0 0.0
          %595 = vmatpush.msra.mxu0 0.0
          %596 = vmatpush.msra.mxu0 0.0
          %597 = vmatpush.msra.mxu0 0.0
          %598 = vmatpush.msra.mxu0 0.0
          %599 = vmatpush.msra.mxu0 0.0
          %600 = vmatpush.msra.mxu0 0.0
          %601 = vmatpush.msra.mxu0 0.0
          %602 = vmatpush.msra.mxu0 0.0
          %603 = vmatpush.msra.mxu0 0.0
          %604 = vmatpush.msra.mxu0 0.0
          %605 = vmatpush.msra.mxu0 %v585
          %606 = vmatmul.f32.gmra.mxu0 %v588
          %v607 = vpop.f32.mrf.mxu0
          %v608 = vadd.f32 0.0, %v607
          %609 = vdwg.mxu0
          %v610 = vadd.f32 %v582, %v608
          %611 = vst.msk [vmem:[%s575] sm:$0xff] %vm331, %v610
          %612 = vst.msk [vmem:[%s550] sm:$0xff] %vm382, %v555
          %v613 = vld [vmem:[%s239] sm:$0xff]
          %v614 = vmul.f32 %v613, 0.17677669
          %v615 = vld [vmem:[%s249] sm:$0xff]
          %v616 = vld [vmem:[%s259] sm:$0xff]
          %618 = vrot.lane.b32.xlu0 %v614, 32
          %v619 = vpop.permute.xlu0 %618
          %621 = vrot.lane.b32.xlu0 %v615, 32
          %v622 = vpop.permute.xlu0 %621
          %v623 = vsel %vm331, %v619, 0
          %v625 = vsel %vm331, %v622, 0
          %627 = vmatpush.xpose.msra.mxu0 0.0
          %628 = vmatpush.xpose.msra.mxu0 0.0
          %629 = vmatpush.xpose.msra.mxu0 0.0
          %630 = vmatpush.xpose.msra.mxu0 0.0
          %631 = vmatpush.xpose.msra.mxu0 0.0
          %632 = vmatpush.xpose.msra.mxu0 0.0
          %633 = vmatpush.xpose.msra.mxu0 0.0
          %634 = vmatpush.xpose.msra.mxu0 0.0
          %635 = vmatpush.xpose.msra.mxu0 0.0
          %636 = vmatpush.xpose.msra.mxu0 0.0
          %637 = vmatpush.xpose.msra.mxu0 0.0
          %638 = vmatpush.xpose.msra.mxu0 0.0
          %639 = vmatpush.xpose.msra.mxu0 0.0
          %640 = vmatpush.xpose.msra.mxu0 0.0
          %641 = vmatpush.xpose.msra.mxu0 0.0
          %642 = vmatpush.xpose.msra.mxu0 %v625
          %643 = vmatmul.f32.gmra.mxu0 %v623
          %v644 = vpop.f32.mrf.mxu0
          %v645 = vadd.f32 0.0, %v644
          %646 = vdwg.mxu0
          %v647 = vsel %vm326, %v645, -1e+30
          %s648 = scalar_lea.vmem [#allocation2], 24
          %v649 = vld [vmem:[%s648] sm:$0xff]
          %v650 = vsel %vm360, %v647, -inf
          %651 = vmax.xlane.f32.xlu0 %v650
          %v652 = vpop.xlane.xlu0 %651
          %v653 = vmax.f32 %v649, %v652
          %v654 = vsub.f32 %v649, %v653
          %v655 = vmul.f32 %v654, 1.442695
          %v656 = vpow.pop %v655
          %658 = vset.pattern.permute.xlu0 0
          %659 = vperm.xlu0 %658, %v653
          %v660 = vpop.permute.xlu0 %659
          %v662 = vsub.f32 %v647, %v660
          %v663 = vmul.f32 %v662, 1.442695
          %v664 = vpow.pop %v663
          %s665 = scalar_lea.vmem [#allocation3], 24
          %v666 = vld [vmem:[%s665] sm:$0xff]
          %v667 = vmul.f32 %v656, %v666
          %v668 = vsel %vm360, %v664, 0.0
          %669 = vadd.xlane.f32.xlu0 %v668
          %v670 = vpop.xlane.xlu0 %669
          %v671 = vadd.f32 %v667, %v670
          %672 = vst.msk [vmem:[%s665] sm:$0xff] %vm382, %v671
          %s673 = scalar_lea.vmem [#allocation4], 24
          %v674 = vld [vmem:[%s673] sm:$0xff]
          %676 = vset.pattern.permute.xlu0 0
          %677 = vperm.xlu0 %676, %v656
          %v678 = vpop.permute.xlu0 %677
          %v680 = vmul.f32 %v678, %v674
          %682 = vrot.lane.b32.xlu0 %v616, 32
          %v683 = vpop.permute.xlu0 %682
          %v686 = vsel %vm360, %v664, 0
          %688 = vmatpush.msra.mxu0 0.0
          %689 = vmatpush.msra.mxu0 0.0
          %690 = vmatpush.msra.mxu0 0.0
          %691 = vmatpush.msra.mxu0 0.0
          %692 = vmatpush.msra.mxu0 0.0
          %693 = vmatpush.msra.mxu0 0.0
          %694 = vmatpush.msra.mxu0 0.0
          %695 = vmatpush.msra.mxu0 0.0
          %696 = vmatpush.msra.mxu0 0.0
          %697 = vmatpush.msra.mxu0 0.0
          %698 = vmatpush.msra.mxu0 0.0
          %699 = vmatpush.msra.mxu0 0.0
          %700 = vmatpush.msra.mxu0 0.0
          %701 = vmatpush.msra.mxu0 0.0
          %702 = vmatpush.msra.mxu0 0.0
          %703 = vmatpush.msra.mxu0 %v683
          %704 = vmatmul.f32.gmra.mxu0 %v686
          %v705 = vpop.f32.mrf.mxu0
          %v706 = vadd.f32 0.0, %v705
          %707 = vdwg.mxu0
          %v708 = vadd.f32 %v680, %v706
          %709 = vst.msk [vmem:[%s673] sm:$0xff] %vm331, %v708
          %710 = vst.msk [vmem:[%s648] sm:$0xff] %vm382, %v653
        $region52: #{tpu_custom_call.1} parent=31 // pred_fallthru
          _
        // Predicated region
        $region53: #{tpu_custom_call.1} parent=31 // pred_check
          %p711 = pneg %p293
        $region54: #{tpu_custom_call.1} parent=31 // pred_check_branch
          %713 = sbr.rel (%p711) target = $region56
        $region55: #{tpu_custom_call.1} parent=31 // pred_region
          %v714 = vld [vmem:[#allocation3] sm:$0xff]
          %v715 = vrcp.pop %v714
          %v716 = vmul.f32 %v714, %v715
          %v717 = vsub.f32 1.0, %v716
          %v718 = vmul.f32 %v715, %v717
          %v719 = vadd.f32 %v715, %v718
          %vm720 = vweird.f32 %v714
          %vm721 = vweird.f32 %v715
          %vm722 = vmor %vm720, %vm721
          %v723 = vsel %vm722, %v715, %v719
          %v724 = vand.u32 2147483647, %v714
          %vm725 = vcmp.eq.f32.partialorder %v724, 8.507059e+37
          %v726 = vand.u32 %v714, 2147483648
          %v727 = vor.u32 1.1754944e-38, %v726
          %v728 = vsel %vm725, %v727, %v723
          %v729 = vld [vmem:[#allocation4] sm:$0xff]
          %731 = vset.pattern.permute.xlu0 0
          %732 = vperm.xlu0 %731, %v728
          %v733 = vpop.permute.xlu0 %732
          %v735 = vmul.f32 %v729, %v733
          %s736 = scalar_lea.vmem [#allocation3], 8
          %v737 = vld [vmem:[%s736] sm:$0xff]
          %v738 = vrcp.pop %v737
          %v739 = vmul.f32 %v737, %v738
          %v740 = vsub.f32 1.0, %v739
          %v741 = vmul.f32 %v738, %v740
          %v742 = vadd.f32 %v738, %v741
          %vm743 = vweird.f32 %v737
          %vm744 = vweird.f32 %v738
          %vm745 = vmor %vm743, %vm744
          %v746 = vsel %vm745, %v738, %v742
          %v747 = vand.u32 2147483647, %v737
          %vm748 = vcmp.eq.f32.partialorder %v747, 8.507059e+37
          %v749 = vand.u32 %v737, 2147483648
          %v750 = vor.u32 1.1754944e-38, %v749
          %v751 = vsel %vm748, %v750, %v746
          %s752 = scalar_lea.vmem [#allocation4], 8
          %v753 = vld [vmem:[%s752] sm:$0xff]
          %755 = vset.pattern.permute.xlu0 0
          %756 = vperm.xlu0 %755, %v751
          %v757 = vpop.permute.xlu0 %756
          %v759 = vmul.f32 %v753, %v757
          %s760 = scalar_lea.vmem [#allocation3], 16
          %v761 = vld [vmem:[%s760] sm:$0xff]
          %v762 = vrcp.pop %v761
          %v763 = vmul.f32 %v761, %v762
          %v764 = vsub.f32 1.0, %v763
          %v765 = vmul.f32 %v762, %v764
          %v766 = vadd.f32 %v762, %v765
          %vm767 = vweird.f32 %v761
          %vm768 = vweird.f32 %v762
          %vm769 = vmor %vm767, %vm768
          %v770 = vsel %vm769, %v762, %v766
          %v771 = vand.u32 2147483647, %v761
          %vm772 = vcmp.eq.f32.partialorder %v771, 8.507059e+37
          %v773 = vand.u32 %v761, 2147483648
          %v774 = vor.u32 1.1754944e-38, %v773
          %v775 = vsel %vm772, %v774, %v770
          %s776 = scalar_lea.vmem [#allocation4], 16
          %v777 = vld [vmem:[%s776] sm:$0xff]
          %779 = vset.pattern.permute.xlu0 0
          %780 = vperm.xlu0 %779, %v775
          %v781 = vpop.permute.xlu0 %780
          %v783 = vmul.f32 %v777, %v781
          %s784 = scalar_lea.vmem [#allocation3], 24
          %v785 = vld [vmem:[%s784] sm:$0xff]
          %v786 = vrcp.pop %v785
          %v787 = vmul.f32 %v785, %v786
          %v788 = vsub.f32 1.0, %v787
          %v789 = vmul.f32 %v786, %v788
          %v790 = vadd.f32 %v786, %v789
          %vm791 = vweird.f32 %v785
          %vm792 = vweird.f32 %v786
          %vm793 = vmor %vm791, %vm792
          %v794 = vsel %vm793, %v786, %v790
          %v795 = vand.u32 2147483647, %v785
          %vm796 = vcmp.eq.f32.partialorder %v795, 8.507059e+37
          %v797 = vand.u32 %v785, 2147483648
          %v798 = vor.u32 1.1754944e-38, %v797
          %v799 = vsel %vm796, %v798, %v794
          %s800 = scalar_lea.vmem [#allocation4], 24
          %v801 = vld [vmem:[%s800] sm:$0xff]
          %803 = vset.pattern.permute.xlu0 0
          %804 = vperm.xlu0 %803, %v799
          %v805 = vpop.permute.xlu0 %804
          %v807 = vmul.f32 %v801, %v805
          %809 = vrot.lane.b32.xlu0 %v759, 32
          %v810 = vpop.permute.xlu0 %809
          %813 = vrot.lane.b32.xlu0 %v783, 64
          %v814 = vpop.permute.xlu0 %813
          %817 = vrot.lane.b32.xlu0 %v807, 96
          %v818 = vpop.permute.xlu0 %817
          %vm820 = vcmask 261120
          %v821 = vsel %vm820, %v735, %v810
          %vm822 = vcmask 523264
          %v823 = vsel %vm822, %v821, %v814
          %vm824 = vcmask 785408
          %v825 = vsel %vm824, %v823, %v818
          %826 = vst [vmem:[%s292] sm:$0xff] %v825
        $region56: #{tpu_custom_call.1} parent=31 // pred_fallthru
          _
        %s827 = sand.u32 %s136, 1
        %s828 = scalar_lea.sflag [#allocation7], %s827
        %s829 = sand.u32 %s136, 1
        %s830 = smul.addr %s829, 8
        %s831 = scalar_lea.vmem [#allocation11], %s830
        // Predicated region
        $region57: #{tpu_custom_call.1} parent=31 // pred_check
          %p832 = pneg %p146
        $region58: #{tpu_custom_call.1} parent=31 // pred_check_branch
          %834 = sbr.rel (%p832) target = $region60
        $region59: #{tpu_custom_call.1} parent=31 // pred_region
          %836 = vsyncadd %s828, 0
          %s837 = sadd.s32 %s29, %s28
          %s838 = smul.addr %s837, 8
          %s839 = scalar_lea.hbm %s3, %s838
          %s841 = sshll.u32 %s831, 4
          %s842 = int_to_ptr.vmem [resolvable:$true] %s841
          %s843 = sshll.u32 %s839, 4
          %s844 = int_to_ptr.hbm [resolvable:$true] %s843
          %846 = dma.vmem_to_hbm [thread:$0]  %s842, 128, %s844, %s828
        $region60: #{tpu_custom_call.1} parent=31 // pred_fallthru
          _
      $region32: #{tpu_custom_call.1} parent=5 // pred_fallthru
        _
      %p847 = scmp.le.s32.totalorder 2, %s18
      // Predicated region
      $region61: #{tpu_custom_call.1} parent=5 // pred_check
        %p848 = pneg %p847
      $region62: #{tpu_custom_call.1} parent=5 // pred_check_branch
        %850 = sbr.rel (%p848) target = $region64
      $region63: #{tpu_custom_call.1} parent=5 // pred_region
        %s851 = ssub.s32 %s18, 2
        // Predicated region
        $region65: #{tpu_custom_call.1} parent=63 // pred_check
          %p852 = pneg %p152
        $region66: #{tpu_custom_call.1} parent=63 // pred_check_branch
          %854 = sbr.rel (%p852) target = $region68
        $region67: #{tpu_custom_call.1} parent=63 // pred_region
          %s855 = sand.u32 %s137, 1
          %s856 = scalar_lea.sflag [#allocation7], %s855
          %s857 = sand.u32 %s137, 1
          %s858 = smul.addr %s857, 8
          %s859 = scalar_lea.vmem [#allocation11], %s858
          %861 = dma.done %s856, 128
        $region68: #{tpu_custom_call.1} parent=63 // pred_fallthru
          _
      $region64: #{tpu_custom_call.1} parent=5 // pred_fallthru
        _
    $region6: #{tpu_custom_call.1} parent=1 // loop_footer
      %s22 = sadd.s32 1, %s18
    $region7: #{tpu_custom_call.1} parent=1 // loop_footer_branch
      %17 = sbr.rel target = $region3
    $region8: #{tpu_custom_call.1} parent=1 // loop_exit
      _
    %862 = vsyncpa [#allocation6], 1
    %s863 = scalar_lea.sflag [#allocation6], 1
    %864 = vsyncpa %s863, 1
    %865 = vsyncpa [#allocation9], 1
    %s866 = scalar_lea.sflag [#allocation9], 1
    %867 = vsyncpa %s866, 1
    %868 = vsyncpa [#allocation7], 1
    %s869 = scalar_lea.sflag [#allocation7], 1
    %870 = vsyncpa %s869, 1

</llo_original>
